<compile_context>
chip_gen: v7x
topology: tpu7x:2x2x1
jax: 0.10.0
libtpu: 0.0.40
codegen_flags: <defaults>
</compile_context>

<pallas_src>
import functools

import jax
import jax.numpy as jnp
from jax import lax
from jax.experimental import pallas as pl
from jax.experimental.pallas import tpu as pltpu

_BIG_NORM = 1e30  # padded-row squared norm -> exp(-gamma * BIG) == 0


def _round_up(x, n):
    return ((x + n - 1) // n) * n


def _mmd_pair_kernel(i_idx_ref, j_idx_ref,
                     xi_ref, x2t_ref, yi_ref, y2t_ref,
                     nxc_ref, nxr_ref, nyc_ref, nyr_ref,
                     o_ref, *, sigmas_desc, geometric, geo_group, seg_len, num_valid):
    c = pl.program_id(0)          # core-split index ("parallel")
    s = pl.program_id(1)          # position inside this split ("arbitrary" reduction)
    t = c * seg_len + s
    i_tile = i_idx_ref[t]
    j_tile = j_idx_ref[t]
    valid = t < num_valid         # padded entries of the pair list contribute nothing
    is_off = j_tile > i_tile

    # Accumulator block (1, 8, 128) stays resident across s; init at the first step.
    @pl.when(s == 0)
    def _init():
        o_ref[...] = jnp.zeros_like(o_ref)

    dn = (((1,), (0,)), ((), ()))  # (tm, dp) x (dp, tn) -> (tm, tn), standard MXU form

    def mix_sum(e):
        # sum over the tile of sum_sigma exp(-gamma_sigma * e), as an f32 scalar.
        acc = None
        if geometric:
            # sigmas (descending) form a ratio-2 sequence -> gammas ascend 4x apart.
            # One EUP exp per group of `geo_group` sigmas; the rest via (p^2)^2 on the
            # VPU (balances EUP/VALU and bounds error growth from repeated squaring).
            k = 0
            while k < len(sigmas_desc):
                grp = sigmas_desc[k:k + geo_group]
                g0 = 1.0 / (2.0 * grp[0] * grp[0])
                p = jnp.exp(-g0 * e)
                term = jnp.sum(p)
                acc = term if acc is None else acc + term
                for _ in grp[1:]:
                    p = p * p          # exp(-2 g e)
                    p = p * p          # exp(-4 g e) -> next (smaller) sigma's kernel
                    acc = acc + jnp.sum(p)
                k += geo_group
            return acc
        for sg in sigmas_desc:
            gamma = 1.0 / (2.0 * sg * sg)
            term = jnp.sum(jnp.exp(-gamma * e))
            acc = term if acc is None else acc + term
        return acc

    def block_sum(row, col_t, n_col, n_row):
        # One gram at a time: dot -> exponent -> exp mixture -> scalar.
        g2 = lax.dot_general(row, col_t, dn, preferred_element_type=jnp.float32)
        # ||a||^2 - 2 a.b + ||b||^2 ; column operands are pre-doubled so no `2*` here.
        e = (n_col - g2) + n_row
        return mix_sum(e)

    xi = xi_ref[...]        # (tile, dp)   rows of X, tile i
    yi = yi_ref[...]        # (tile, dp)   rows of Y, tile i
    x2t = x2t_ref[...]      # (dp, tile)   2 * X^T, tile j columns
    y2t = y2t_ref[...]      # (dp, tile)   2 * Y^T, tile j columns
    nxc = nxc_ref[...]      # (tile, 1)    ||x||^2, tile i (BIG on padded rows)
    nxr = nxr_ref[...]      # (1, tile)    ||x||^2, tile j
    nyc = nyc_ref[...]      # (tile, 1)    ||y||^2, tile i
    nyr = nyr_ref[...]      # (1, tile)    ||y||^2, tile j

    s_xx = block_sum(xi, x2t, nxc, nxr)     # K_XX block (i, j)
    s_xy = block_sum(xi, y2t, nxc, nyr)     # K_XY block (i, j)
    s_yy = block_sum(yi, y2t, nyc, nyr)     # K_YY block (i, j)

    w_sym = jnp.where(valid, jnp.where(is_off, 2.0, 1.0), 0.0)  # K_XX/K_YY symmetry
    w_xy = jnp.where(valid, 1.0, 0.0)

    lane = lax.broadcasted_iota(jnp.int32, o_ref.shape, 2)
    sub = lax.broadcasted_iota(jnp.int32, o_ref.shape, 1)
    first = sub == 0

    o_ref[...] = o_ref[...] + (
        jnp.where(first & (lane == 0), w_sym * s_xx, 0.0)
        + jnp.where(first & (lane == 1), w_xy * s_xy, 0.0)
        + jnp.where(first & (lane == 2), w_sym * s_yy, 0.0))

    @pl.when(jnp.logical_and(valid, is_off))
    def _mirror_xy():
        # Mirror K_XY block (rows = X tile j, cols = Y tile i), computed transposed
        # ([b, a] layout) so it reuses nyc (col) and nxr (row) with a standard dot.
        s_ba = block_sum(yi, x2t, nyc, nxr)
        o_ref[...] = o_ref[...] + jnp.where(first & (lane == 1), s_ba, 0.0)


def mix_rbf_mmd2_pallas(X, Y, sigma_list, biased=True, tile=None,
                        gram_dtype=jnp.bfloat16, geo_group=2):
    """Pallas-TPU equivalent of MixRBFMMDLoss(sigma_list, biased)(X, Y)."""
    assert X.ndim == 2 and X.shape == Y.shape
    m, d = X.shape
    sigmas = tuple(sorted(float(s) for s in sigma_list))
    num_sigma = len(sigmas)
    geometric = num_sigma > 1 and all(
        abs(sigmas[k + 1] / sigmas[k] - 2.0) < 1e-6 for k in range(num_sigma - 1))
    sigmas_desc = tuple(sorted(sigmas, reverse=True))   # ascending gamma

    dp = _round_up(d, 128)                              # pad features to a lane tile
    gram_dtype = jnp.dtype(gram_dtype)
    gb = gram_dtype.itemsize

    # Hardware-derived VMEM budget (v5e/v6e: 128 MiB, v7x: 64 MiB per TensorCore).
    try:
        vmem_cap = int(pltpu.get_tpu_info().vmem_capacity_bytes)
    except Exception:  # pragma: no cover - conservative fallback
        vmem_cap = 64 << 20
    budget = min(int(vmem_cap * 0.45), 48 << 20)
    vmem_limit = max(32 << 20, min(int(vmem_cap * 0.70), 96 << 20))

    def vmem_estimate(t):
        data = 2 * 4 * t * dp * gb           # Xi, Yi, 2X^T_j, 2Y^T_j, double-buffered
        norms = 2 * 2 * (t * 512 + t * 32)   # (t,1)/(1,t) f32 blocks, padded layout
        temps = 4 * t * t * 4                # live (t,t) f32 temporaries
        return data + norms + temps + (8 * 128 * 4)

    if tile is None:
        single = _round_up(m, 8)
        if single <= 512 and vmem_estimate(single) <= budget:
            tile = single                    # one tile covers all rows
        else:
            tile = 512
            while tile > 128 and vmem_estimate(tile) > budget:
                tile //= 2
    assert tile % 8 == 0
    m_pad = _round_up(m, tile)
    if m_pad > tile:
        assert tile % 128 == 0, "multi-tile grids need a lane-aligned tile size"

    # Quantize gram operands once; norms come from the SAME quantized values so the
    # K diagonal is exactly exp(0) = 1 per sigma even with bf16 grams.
    Xq = X.astype(jnp.float32).astype(gram_dtype)
    Yq = Y.astype(jnp.float32).astype(gram_dtype)
    Xp = jnp.pad(Xq, ((0, m_pad - m), (0, dp - d)))
    Yp = jnp.pad(Yq, ((0, m_pad - m), (0, dp - d)))
    # Pre-doubled, pre-transposed column operands (exact in bf16/f32): folds the -2
    # into the gram and keeps every dot in the standard (row, k) x (k, col) form.
    X2T = (Xp * 2).T
    Y2T = (Yp * 2).T

    nX = jnp.sum(Xq.astype(jnp.float32) ** 2, axis=1)
    nY = jnp.sum(Yq.astype(jnp.float32) ** 2, axis=1)
    pad_tail = jnp.full((m_pad - m,), _BIG_NORM, jnp.float32)
    nXp = jnp.concatenate([nX, pad_tail])
    nYp = jnp.concatenate([nY, pad_tail])
    nX_col, nX_row = nXp[:, None], nXp[None, :]
    nY_col, nY_row = nYp[:, None], nYp[None, :]

    # Upper-triangular tile traversal, split into 2 chunks along a "parallel" axis so
    # v7x's two TensorCores both get work (v5e/v6e just run the chunks sequentially).
    n_tiles = m_pad // tile
    pairs = [(i, j) for i in range(n_tiles) for j in range(i, n_tiles)]
    num_pairs = len(pairs)
    n_splits = 2 if num_pairs >= 2 else 1
    seg_len = -(-num_pairs // n_splits)
    pairs = pairs + [(0, 0)] * (n_splits * seg_len - num_pairs)
    i_idx = jnp.asarray([p[0] for p in pairs], jnp.int32)
    j_idx = jnp.asarray([p[1] for p in pairs], jnp.int32)

    def t_of(c, s):
        return c * seg_len + s

    row_spec = pl.BlockSpec((tile, dp), lambda c, s, ii, jj: (ii[t_of(c, s)], 0))
    colt_spec = pl.BlockSpec((dp, tile), lambda c, s, ii, jj: (0, jj[t_of(c, s)]))
    ncol_spec = pl.BlockSpec((tile, 1), lambda c, s, ii, jj: (ii[t_of(c, s)], 0))
    nrow_spec = pl.BlockSpec((1, tile), lambda c, s, ii, jj: (0, jj[t_of(c, s)]))
    out_spec = pl.BlockSpec((1, 8, 128), lambda c, s, ii, jj: (c, 0, 0))

    n_off = num_pairs - n_tiles
    grams = 3 * n_tiles + 4 * n_off
    exps_per_elem = (-(-num_sigma // geo_group)) if geometric else num_sigma
    cost = pl.CostEstimate(
        flops=int(grams * 2 * tile * tile * dp + grams * 6 * tile * tile),
        transcendentals=int(grams * tile * tile * exps_per_elem),
        bytes_accessed=int(n_splits * seg_len * 4 * tile * dp * gb
                           + 4 * m_pad * dp * gb),
    )

    kernel = functools.partial(
        _mmd_pair_kernel, sigmas_desc=sigmas_desc, geometric=geometric,
        geo_group=geo_group, seg_len=seg_len, num_valid=num_pairs)

    partials = pl.pallas_call(
        kernel,
        out_shape=jax.ShapeDtypeStruct((n_splits, 8, 128), jnp.float32),
        grid_spec=pltpu.PrefetchScalarGridSpec(
            num_scalar_prefetch=2,
            grid=(n_splits, seg_len),
            in_specs=[row_spec, colt_spec, row_spec, colt_spec,
                      ncol_spec, nrow_spec, ncol_spec, nrow_spec],
            out_specs=out_spec),
        compiler_params=pltpu.CompilerParams(
            dimension_semantics=("parallel", "arbitrary"),
            vmem_limit_bytes=vmem_limit),
        cost_estimate=cost,
    )(i_idx, j_idx, Xp, X2T, Yp, Y2T, nX_col, nX_row, nY_col, nY_row)

    s_xx = jnp.sum(partials[:, 0, 0])
    s_xy = jnp.sum(partials[:, 0, 1])
    s_yy = jnp.sum(partials[:, 0, 2])

    mf = jnp.float32(m)
    if biased:
        # (Kt_XX + sum_diag_X + Kt_YY + sum_diag_Y - 2 K_XY) / m^2 == full sums / m^2
        return (s_xx + s_yy - 2.0 * s_xy) / (mf * mf)
    # diagonal exponent is analytically 0 -> each sigma contributes 1 per diag entry
    sum_diag = jnp.float32(m * num_sigma)
    return ((s_xx - sum_diag) / (mf * (mf - 1.0))
            + (s_yy - sum_diag) / (mf * (mf - 1.0))
            - 2.0 * s_xy / (mf * mf))


class MixRBFMMDLoss:
    """Drop-in forward-pass equivalent of the PyTorch module."""

    def __init__(self, sigma_list, biased=True):
        self.sigma_list = tuple(float(s) for s in sigma_list)
        self.biased = biased

    def __call__(self, X, Y):
        return mix_rbf_mmd2_pallas(X, Y, self.sigma_list, biased=self.biased)


def _mix_rbf_mmd2_ref(X, Y, sigma_list, biased=True, quantize_bf16=False):
    # Pure-JAX reference mirroring the PyTorch code (optionally with the same bf16
    # input quantization the kernel applies to its gram operands).
    m = X.shape[0]
    Xr = X.astype(jnp.float32)
    Yr = Y.astype(jnp.float32)
    if quantize_bf16:
        Xr = Xr.astype(jnp.bfloat16).astype(jnp.float32)
        Yr = Yr.astype(jnp.bfloat16).astype(jnp.float32)
    Z = jnp.concatenate([Xr, Yr], axis=0)
    ZZT = jnp.dot(Z, Z.T, precision=jax.lax.Precision.HIGHEST)
    diag = jnp.diag(ZZT)[:, None]
    exponent = diag - 2.0 * ZZT + diag.T
    K = jnp.zeros_like(exponent)
    for sigma in sigma_list:
        gamma = 1.0 / (2.0 * float(sigma) ** 2)
        K = K + jnp.exp(-gamma * exponent)
    K_XX, K_XY, K_YY = K[:m, :m], K[:m, m:], K[m:, m:]
    sum_diag_X = jnp.sum(jnp.diag(K_XX))
    sum_diag_Y = jnp.sum(jnp.diag(K_YY))
    Kt_XX_sum = jnp.sum(K_XX) - sum_diag_X
    Kt_YY_sum = jnp.sum(K_YY) - sum_diag_Y
    K_XY_sum = jnp.sum(K_XY)
    if biased:
        return ((Kt_XX_sum + sum_diag_X) / (m * m)
                + (Kt_YY_sum + sum_diag_Y) / (m * m)
                - 2.0 * K_XY_sum / (m * m))
    return (Kt_XX_sum / (m * (m - 1))
            + Kt_YY_sum / (m * (m - 1))
            - 2.0 * K_XY_sum / (m * m))


if __name__ == "__main__":
    key = jax.random.PRNGKey(0)
    k1, k2, k3, k4, k5, k6 = jax.random.split(key, 6)

    # Case 1: module defaults (geometric sigmas, biased), single tile, bf16 grams.
    sigma_list = [1.0, 2.0, 4.0, 8.0]
    m, d = 8, 32
    X = jax.random.normal(k1, (m, d), dtype=jnp.float32)
    Y = jax.random.normal(k2, (m, d), dtype=jnp.float32) + 0.5
    loss = MixRBFMMDLoss(sigma_list, biased=True)
    out1 = jax.block_until_ready(loss(X, Y))
    ref1_q = _mix_rbf_mmd2_ref(X, Y, sigma_list, biased=True, quantize_bf16=True)
    ref1_f = _mix_rbf_mmd2_ref(X, Y, sigma_list, biased=True)
    assert jnp.allclose(out1, ref1_q, rtol=5e-3, atol=1e-5), (out1, ref1_q)
    assert jnp.allclose(out1, ref1_f, rtol=3e-2, atol=1e-4), (out1, ref1_f)

    # Case 2: non-geometric sigmas, unbiased, multi-tile grid + row padding,
    # exact f32 grams (exercises symmetry traversal, mirror-XY path, core split).
    sigma_list2 = [0.9, 2.3]
    m2, d2 = 130, 48
    X2 = jax.random.normal(k3, (m2, d2), dtype=jnp.float32)
    Y2 = jax.random.normal(k4, (m2, d2), dtype=jnp.float32) + 0.3
    out2 = jax.block_until_ready(
        mix_rbf_mmd2_pallas(X2, Y2, sigma_list2, biased=False, tile=128,
                            gram_dtype=jnp.float32))
    ref2 = _mix_rbf_mmd2_ref(X2, Y2, sigma_list2, biased=False)
    assert jnp.allclose(out2, ref2, rtol=5e-3, atol=2e-5), (out2, ref2)

    # Case 3: geometric sigmas, biased, bf16 grams, 3x3 tile triangle split over the
    # two-chunk parallel axis, with row padding.
    m3, d3 = 280, 40
    X3 = jax.random.normal(k5, (m3, d3), dtype=jnp.float32)
    Y3 = jax.random.normal(k6, (m3, d3), dtype=jnp.float32) + 1.0
    out3 = jax.block_until_ready(
        mix_rbf_mmd2_pallas(X3, Y3, sigma_list, biased=True, tile=128))
    ref3_q = _mix_rbf_mmd2_ref(X3, Y3, sigma_list, biased=True, quantize_bf16=True)
    ref3_f = _mix_rbf_mmd2_ref(X3, Y3, sigma_list, biased=True)
    assert jnp.allclose(out3, ref3_q, rtol=5e-3, atol=1e-5), (out3, ref3_q)
    assert jnp.allclose(out3, ref3_f, rtol=3e-2, atol=1e-4), (out3, ref3_f)

    print("KERNEL_OK")
</pallas_src>

<mosaic_0001>
module attributes {stable_mosaic.version = 11 : i64} {
  func.func @_mmd_pair_kernel(%arg0: i32, %arg1: i32, %arg2: memref<1xi32, #tpu.memory_space<smem>>, %arg3: memref<1xi32, #tpu.memory_space<smem>>, %arg4: memref<8x128xbf16, #tpu.memory_space<vmem>>, %arg5: memref<128x8xbf16, #tpu.memory_space<vmem>>, %arg6: memref<8x128xbf16, #tpu.memory_space<vmem>>, %arg7: memref<128x8xbf16, #tpu.memory_space<vmem>>, %arg8: memref<8x1xf32, #tpu.memory_space<vmem>>, %arg9: memref<1x8xf32, #tpu.memory_space<vmem>>, %arg10: memref<8x1xf32, #tpu.memory_space<vmem>>, %arg11: memref<1x8xf32, #tpu.memory_space<vmem>>, %arg12: memref<1x8x128xf32, #tpu.memory_space<vmem>>) attributes {dimension_semantics = [#tpu.dimension_semantics<parallel>, #tpu.dimension_semantics<arbitrary>], iteration_bounds = array<i64: 1, 1>, scalar_prefetch = 2 : i64, scratch_operands = 0 : i64, tpu.core_type = #tpu.core_type<tc>, window_params = [{transform_indices = @transform_0, window_bounds = array<i64: 8, 128>}, {transform_indices = @transform_1, window_bounds = array<i64: 128, 8>}, {transform_indices = @transform_2, window_bounds = array<i64: 8, 128>}, {transform_indices = @transform_3, window_bounds = array<i64: 128, 8>}, {transform_indices = @transform_4, window_bounds = array<i64: 8, 1>}, {transform_indices = @transform_5, window_bounds = array<i64: 1, 8>}, {transform_indices = @transform_6, window_bounds = array<i64: 8, 1>}, {transform_indices = @transform_7, window_bounds = array<i64: 1, 8>}, {transform_indices = @transform_8, window_bounds = array<i64: 1, 8, 128>}]} {
    %c1_i32 = arith.constant 1 : i32
    %0 = arith.muli %arg0, %c1_i32 : i32
    %1 = arith.addi %0, %arg1 : i32
    %2 = arith.index_cast %1 : i32 to index
    %3 = memref.load %arg2[%2] : memref<1xi32, #tpu.memory_space<smem>>
    %4 = arith.index_cast %1 : i32 to index
    %5 = memref.load %arg3[%4] : memref<1xi32, #tpu.memory_space<smem>>
    %c1_i32_0 = arith.constant 1 : i32
    %6 = arith.cmpi slt, %1, %c1_i32_0 : i32
    %7 = arith.cmpi sgt, %5, %3 : i32
    %c0_i32 = arith.constant 0 : i32
    %8 = arith.cmpi eq, %arg1, %c0_i32 : i32
    %9 = arith.extui %8 : i1 to i32
    %c0_i32_1 = arith.constant 0 : i32
    %10 = arith.cmpi ne, %9, %c0_i32_1 : i32
    scf.if %10 {
      %cst_55 = arith.constant 0.000000e+00 : f32
      %157 = vector.broadcast %cst_55 : f32 to vector<1x8x128xf32>
      %c0_56 = arith.constant 0 : index
      %c0_57 = arith.constant 0 : index
      %c0_58 = arith.constant 0 : index
      %158 = vector.load %arg12[%c0_56, %c0_57, %c0_58] : memref<1x8x128xf32, #tpu.memory_space<vmem>>, vector<1x8x128xf32>
      tpu.vector_store %arg12[%c0_56, %c0_57, %c0_58], %157 {strides = array<i32>} : memref<1x8x128xf32, #tpu.memory_space<vmem>>, vector<1x8x128xf32>,
    } else {
    }
    %c0 = arith.constant 0 : index
    %c0_2 = arith.constant 0 : index
    %11 = vector.load %arg4[%c0, %c0_2] : memref<8x128xbf16, #tpu.memory_space<vmem>>, vector<8x128xbf16>
    %c0_3 = arith.constant 0 : index
    %c0_4 = arith.constant 0 : index
    %12 = vector.load %arg6[%c0_3, %c0_4] : memref<8x128xbf16, #tpu.memory_space<vmem>>, vector<8x128xbf16>
    %c0_5 = arith.constant 0 : index
    %c0_6 = arith.constant 0 : index
    %13 = vector.load %arg5[%c0_5, %c0_6] : memref<128x8xbf16, #tpu.memory_space<vmem>>, vector<128x8xbf16>
    %c0_7 = arith.constant 0 : index
    %c0_8 = arith.constant 0 : index
    %14 = vector.load %arg7[%c0_7, %c0_8] : memref<128x8xbf16, #tpu.memory_space<vmem>>, vector<128x8xbf16>
    %c0_9 = arith.constant 0 : index
    %c0_10 = arith.constant 0 : index
    %15 = vector.load %arg8[%c0_9, %c0_10] : memref<8x1xf32, #tpu.memory_space<vmem>>, vector<8x1xf32>
    %c0_11 = arith.constant 0 : index
    %c0_12 = arith.constant 0 : index
    %16 = vector.load %arg9[%c0_11, %c0_12] : memref<1x8xf32, #tpu.memory_space<vmem>>, vector<1x8xf32>
    %c0_13 = arith.constant 0 : index
    %c0_14 = arith.constant 0 : index
    %17 = vector.load %arg10[%c0_13, %c0_14] : memref<8x1xf32, #tpu.memory_space<vmem>>, vector<8x1xf32>
    %c0_15 = arith.constant 0 : index
    %c0_16 = arith.constant 0 : index
    %18 = vector.load %arg11[%c0_15, %c0_16] : memref<1x8xf32, #tpu.memory_space<vmem>>, vector<1x8xf32>
    %cst = arith.constant dense<0.000000e+00> : vector<8x8xf32>
    %19 = tpu.matmul %11, %13, %cst {dimension_numbers = #tpu.dot_dimension_numbers<[1], [0], [0], [1], [0, 0, 1, 1], [], []>} : vector<8x128xbf16>, vector<128x8xbf16>, vector<8x8xf32> -> vector<8x8xf32>
    %20 = vector.broadcast %15 : vector<8x1xf32> to vector<8x8xf32>
    %21 = arith.subf %20, %19 : vector<8x8xf32>
    %22 = vector.broadcast %16 : vector<1x8xf32> to vector<8x8xf32>
    %23 = arith.addf %21, %22 : vector<8x8xf32>
    %cst_17 = arith.constant -7.812500e-03 : f32
    %24 = vector.broadcast %cst_17 : f32 to vector<8x8xf32>
    %25 = arith.mulf %24, %23 : vector<8x8xf32>
    %26 = math.exp %25 : vector<8x8xf32>
    %27 = vector.shape_cast %26 : vector<8x8xf32> to vector<1x8x8xf32>
    %cst_18 = arith.constant dense<0.000000e+00> : vector<1xf32>
    %28 = vector.multi_reduction <add>, %27, %cst_18 [1, 2] : vector<1x8x8xf32> to vector<1xf32>
    %29 = vector.shape_cast %28 : vector<1xf32> to vector<1x1x1xf32>
    %30 = vector.extract %29[0, 0, 0] : f32 from vector<1x1x1xf32>
    %31 = arith.mulf %26, %26 : vector<8x8xf32>
    %32 = arith.mulf %31, %31 : vector<8x8xf32>
    %33 = vector.shape_cast %32 : vector<8x8xf32> to vector<1x8x8xf32>
    %cst_19 = arith.constant dense<0.000000e+00> : vector<1xf32>
    %34 = vector.multi_reduction <add>, %33, %cst_19 [1, 2] : vector<1x8x8xf32> to vector<1xf32>
    %35 = vector.shape_cast %34 : vector<1xf32> to vector<1x1x1xf32>
    %36 = vector.extract %35[0, 0, 0] : f32 from vector<1x1x1xf32>
    %37 = arith.addf %30, %36 : f32
    %cst_20 = arith.constant -1.250000e-01 : f32
    %38 = vector.broadcast %cst_20 : f32 to vector<8x8xf32>
    %39 = arith.mulf %38, %23 : vector<8x8xf32>
    %40 = math.exp %39 : vector<8x8xf32>
    %41 = vector.shape_cast %40 : vector<8x8xf32> to vector<1x8x8xf32>
    %cst_21 = arith.constant dense<0.000000e+00> : vector<1xf32>
    %42 = vector.multi_reduction <add>, %41, %cst_21 [1, 2] : vector<1x8x8xf32> to vector<1xf32>
    %43 = vector.shape_cast %42 : vector<1xf32> to vector<1x1x1xf32>
    %44 = vector.extract %43[0, 0, 0] : f32 from vector<1x1x1xf32>
    %45 = arith.addf %37, %44 : f32
    %46 = arith.mulf %40, %40 : vector<8x8xf32>
    %47 = arith.mulf %46, %46 : vector<8x8xf32>
    %48 = vector.shape_cast %47 : vector<8x8xf32> to vector<1x8x8xf32>
    %cst_22 = arith.constant dense<0.000000e+00> : vector<1xf32>
    %49 = vector.multi_reduction <add>, %48, %cst_22 [1, 2] : vector<1x8x8xf32> to vector<1xf32>
    %50 = vector.shape_cast %49 : vector<1xf32> to vector<1x1x1xf32>
    %51 = vector.extract %50[0, 0, 0] : f32 from vector<1x1x1xf32>
    %52 = arith.addf %45, %51 : f32
    %cst_23 = arith.constant dense<0.000000e+00> : vector<8x8xf32>
    %53 = tpu.matmul %11, %14, %cst_23 {dimension_numbers = #tpu.dot_dimension_numbers<[1], [0], [0], [1], [0, 0, 1, 1], [], []>} : vector<8x128xbf16>, vector<128x8xbf16>, vector<8x8xf32> -> vector<8x8xf32>
    %54 = vector.broadcast %15 : vector<8x1xf32> to vector<8x8xf32>
    %55 = arith.subf %54, %53 : vector<8x8xf32>
    %56 = vector.broadcast %18 : vector<1x8xf32> to vector<8x8xf32>
    %57 = arith.addf %55, %56 : vector<8x8xf32>
    %cst_24 = arith.constant -7.812500e-03 : f32
    %58 = vector.broadcast %cst_24 : f32 to vector<8x8xf32>
    %59 = arith.mulf %58, %57 : vector<8x8xf32>
    %60 = math.exp %59 : vector<8x8xf32>
    %61 = vector.shape_cast %60 : vector<8x8xf32> to vector<1x8x8xf32>
    %cst_25 = arith.constant dense<0.000000e+00> : vector<1xf32>
    %62 = vector.multi_reduction <add>, %61, %cst_25 [1, 2] : vector<1x8x8xf32> to vector<1xf32>
    %63 = vector.shape_cast %62 : vector<1xf32> to vector<1x1x1xf32>
    %64 = vector.extract %63[0, 0, 0] : f32 from vector<1x1x1xf32>
    %65 = arith.mulf %60, %60 : vector<8x8xf32>
    %66 = arith.mulf %65, %65 : vector<8x8xf32>
    %67 = vector.shape_cast %66 : vector<8x8xf32> to vector<1x8x8xf32>
    %cst_26 = arith.constant dense<0.000000e+00> : vector<1xf32>
    %68 = vector.multi_reduction <add>, %67, %cst_26 [1, 2] : vector<1x8x8xf32> to vector<1xf32>
    %69 = vector.shape_cast %68 : vector<1xf32> to vector<1x1x1xf32>
    %70 = vector.extract %69[0, 0, 0] : f32 from vector<1x1x1xf32>
    %71 = arith.addf %64, %70 : f32
    %cst_27 = arith.constant -1.250000e-01 : f32
    %72 = vector.broadcast %cst_27 : f32 to vector<8x8xf32>
    %73 = arith.mulf %72, %57 : vector<8x8xf32>
    %74 = math.exp %73 : vector<8x8xf32>
    %75 = vector.shape_cast %74 : vector<8x8xf32> to vector<1x8x8xf32>
    %cst_28 = arith.constant dense<0.000000e+00> : vector<1xf32>
    %76 = vector.multi_reduction <add>, %75, %cst_28 [1, 2] : vector<1x8x8xf32> to vector<1xf32>
    %77 = vector.shape_cast %76 : vector<1xf32> to vector<1x1x1xf32>
    %78 = vector.extract %77[0, 0, 0] : f32 from vector<1x1x1xf32>
    %79 = arith.addf %71, %78 : f32
    %80 = arith.mulf %74, %74 : vector<8x8xf32>
    %81 = arith.mulf %80, %80 : vector<8x8xf32>
    %82 = vector.shape_cast %81 : vector<8x8xf32> to vector<1x8x8xf32>
    %cst_29 = arith.constant dense<0.000000e+00> : vector<1xf32>
    %83 = vector.multi_reduction <add>, %82, %cst_29 [1, 2] : vector<1x8x8xf32> to vector<1xf32>
    %84 = vector.shape_cast %83 : vector<1xf32> to vector<1x1x1xf32>
    %85 = vector.extract %84[0, 0, 0] : f32 from vector<1x1x1xf32>
    %86 = arith.addf %79, %85 : f32
    %cst_30 = arith.constant dense<0.000000e+00> : vector<8x8xf32>
    %87 = tpu.matmul %12, %14, %cst_30 {dimension_numbers = #tpu.dot_dimension_numbers<[1], [0], [0], [1], [0, 0, 1, 1], [], []>} : vector<8x128xbf16>, vector<128x8xbf16>, vector<8x8xf32> -> vector<8x8xf32>
    %88 = vector.broadcast %17 : vector<8x1xf32> to vector<8x8xf32>
    %89 = arith.subf %88, %87 : vector<8x8xf32>
    %90 = vector.broadcast %18 : vector<1x8xf32> to vector<8x8xf32>
    %91 = arith.addf %89, %90 : vector<8x8xf32>
    %cst_31 = arith.constant -7.812500e-03 : f32
    %92 = vector.broadcast %cst_31 : f32 to vector<8x8xf32>
    %93 = arith.mulf %92, %91 : vector<8x8xf32>
    %94 = math.exp %93 : vector<8x8xf32>
    %95 = vector.shape_cast %94 : vector<8x8xf32> to vector<1x8x8xf32>
    %cst_32 = arith.constant dense<0.000000e+00> : vector<1xf32>
    %96 = vector.multi_reduction <add>, %95, %cst_32 [1, 2] : vector<1x8x8xf32> to vector<1xf32>
    %97 = vector.shape_cast %96 : vector<1xf32> to vector<1x1x1xf32>
    %98 = vector.extract %97[0, 0, 0] : f32 from vector<1x1x1xf32>
    %99 = arith.mulf %94, %94 : vector<8x8xf32>
    %100 = arith.mulf %99, %99 : vector<8x8xf32>
    %101 = vector.shape_cast %100 : vector<8x8xf32> to vector<1x8x8xf32>
    %cst_33 = arith.constant dense<0.000000e+00> : vector<1xf32>
    %102 = vector.multi_reduction <add>, %101, %cst_33 [1, 2] : vector<1x8x8xf32> to vector<1xf32>
    %103 = vector.shape_cast %102 : vector<1xf32> to vector<1x1x1xf32>
    %104 = vector.extract %103[0, 0, 0] : f32 from vector<1x1x1xf32>
    %105 = arith.addf %98, %104 : f32
    %cst_34 = arith.constant -1.250000e-01 : f32
    %106 = vector.broadcast %cst_34 : f32 to vector<8x8xf32>
    %107 = arith.mulf %106, %91 : vector<8x8xf32>
    %108 = math.exp %107 : vector<8x8xf32>
    %109 = vector.shape_cast %108 : vector<8x8xf32> to vector<1x8x8xf32>
    %cst_35 = arith.constant dense<0.000000e+00> : vector<1xf32>
    %110 = vector.multi_reduction <add>, %109, %cst_35 [1, 2] : vector<1x8x8xf32> to vector<1xf32>
    %111 = vector.shape_cast %110 : vector<1xf32> to vector<1x1x1xf32>
    %112 = vector.extract %111[0, 0, 0] : f32 from vector<1x1x1xf32>
    %113 = arith.addf %105, %112 : f32
    %114 = arith.mulf %108, %108 : vector<8x8xf32>
    %115 = arith.mulf %114, %114 : vector<8x8xf32>
    %116 = vector.shape_cast %115 : vector<8x8xf32> to vector<1x8x8xf32>
    %cst_36 = arith.constant dense<0.000000e+00> : vector<1xf32>
    %117 = vector.multi_reduction <add>, %116, %cst_36 [1, 2] : vector<1x8x8xf32> to vector<1xf32>
    %118 = vector.shape_cast %117 : vector<1xf32> to vector<1x1x1xf32>
    %119 = vector.extract %118[0, 0, 0] : f32 from vector<1x1x1xf32>
    %120 = arith.addf %113, %119 : f32
    %cst_37 = arith.constant 2.000000e+00 : f32
    %cst_38 = arith.constant 1.000000e+00 : f32
    %121 = arith.select %7, %cst_37, %cst_38 : f32
    %cst_39 = arith.constant 0.000000e+00 : f32
    %122 = arith.select %6, %121, %cst_39 : f32
    %cst_40 = arith.constant 1.000000e+00 : f32
    %cst_41 = arith.constant 0.000000e+00 : f32
    %123 = arith.select %6, %cst_40, %cst_41 : f32
    %124 = tpu.iota {dimensions = array<i32: 2>} : vector<1x8x128xi32>
    %125 = tpu.iota {dimensions = array<i32: 1>} : vector<1x8x128xi32>
    %c0_i32_42 = arith.constant 0 : i32
    %126 = vector.broadcast %c0_i32_42 : i32 to vector<1x8x128xi32>
    %127 = arith.cmpi eq, %125, %126 : vector<1x8x128xi32>
    %c0_43 = arith.constant 0 : index
    %c0_44 = arith.constant 0 : index
    %c0_45 = arith.constant 0 : index
    %128 = vector.load %arg12[%c0_43, %c0_44, %c0_45] : memref<1x8x128xf32, #tpu.memory_space<vmem>>, vector<1x8x128xf32>
    %c0_i32_46 = arith.constant 0 : i32
    %129 = vector.broadcast %c0_i32_46 : i32 to vector<1x8x128xi32>
    %130 = arith.cmpi eq, %124, %129 : vector<1x8x128xi32>
    %131 = arith.andi %127, %130 : vector<1x8x128xi1>
    %132 = arith.mulf %122, %52 : f32
    %cst_47 = arith.constant 0.000000e+00 : f32
    %133 = vector.broadcast %132 : f32 to vector<1x8x128xf32>
    %134 = vector.broadcast %cst_47 : f32 to vector<1x8x128xf32>
    %135 = arith.select %131, %133, %134 : vector<1x8x128xi1>, vector<1x8x128xf32>
    %c1_i32_48 = arith.constant 1 : i32
    %136 = vector.broadcast %c1_i32_48 : i32 to vector<1x8x128xi32>
    %137 = arith.cmpi eq, %124, %136 : vector<1x8x128xi32>
    %138 = arith.andi %127, %137 : vector<1x8x128xi1>
    %139 = arith.mulf %123, %86 : f32
    %cst_49 = arith.constant 0.000000e+00 : f32
    %140 = vector.broadcast %139 : f32 to vector<1x8x128xf32>
    %141 = vector.broadcast %cst_49 : f32 to vector<1x8x128xf32>
    %142 = arith.select %138, %140, %141 : vector<1x8x128xi1>, vector<1x8x128xf32>
    %143 = arith.addf %135, %142 : vector<1x8x128xf32>
    %c2_i32 = arith.constant 2 : i32
    %144 = vector.broadcast %c2_i32 : i32 to vector<1x8x128xi32>
    %145 = arith.cmpi eq, %124, %144 : vector<1x8x128xi32>
    %146 = arith.andi %127, %145 : vector<1x8x128xi1>
    %147 = arith.mulf %122, %120 : f32
    %cst_50 = arith.constant 0.000000e+00 : f32
    %148 = vector.broadcast %147 : f32 to vector<1x8x128xf32>
    %149 = vector.broadcast %cst_50 : f32 to vector<1x8x128xf32>
    %150 = arith.select %146, %148, %149 : vector<1x8x128xi1>, vector<1x8x128xf32>
    %151 = arith.addf %143, %150 : vector<1x8x128xf32>
    %152 = arith.addf %128, %151 : vector<1x8x128xf32>
    %c0_51 = arith.constant 0 : index
    %c0_52 = arith.constant 0 : index
    %c0_53 = arith.constant 0 : index
    %153 = vector.load %arg12[%c0_51, %c0_52, %c0_53] : memref<1x8x128xf32, #tpu.memory_space<vmem>>, vector<1x8x128xf32>
    tpu.vector_store %arg12[%c0_51, %c0_52, %c0_53], %152 {strides = array<i32>} : memref<1x8x128xf32, #tpu.memory_space<vmem>>, vector<1x8x128xf32>,
    %154 = arith.andi %6, %7 : i1
    %155 = arith.extui %154 : i1 to i32
    %c0_i32_54 = arith.constant 0 : i32
    %156 = arith.cmpi ne, %155, %c0_i32_54 : i32
    scf.if %156 {
      %cst_55 = arith.constant dense<0.000000e+00> : vector<8x8xf32>
      %157 = tpu.matmul %12, %13, %cst_55 {dimension_numbers = #tpu.dot_dimension_numbers<[1], [0], [0], [1], [0, 0, 1, 1], [], []>} : vector<8x128xbf16>, vector<128x8xbf16>, vector<8x8xf32> -> vector<8x8xf32>
      %158 = vector.broadcast %17 : vector<8x1xf32> to vector<8x8xf32>
      %159 = arith.subf %158, %157 : vector<8x8xf32>
      %160 = vector.broadcast %16 : vector<1x8xf32> to vector<8x8xf32>
      %161 = arith.addf %159, %160 : vector<8x8xf32>
      %cst_56 = arith.constant -7.812500e-03 : f32
      %162 = vector.broadcast %cst_56 : f32 to vector<8x8xf32>
      %163 = arith.mulf %162, %161 : vector<8x8xf32>
      %164 = math.exp %163 : vector<8x8xf32>
      %165 = vector.shape_cast %164 : vector<8x8xf32> to vector<1x8x8xf32>
      %cst_57 = arith.constant dense<0.000000e+00> : vector<1xf32>
      %166 = vector.multi_reduction <add>, %165, %cst_57 [1, 2] : vector<1x8x8xf32> to vector<1xf32>
      %167 = vector.shape_cast %166 : vector<1xf32> to vector<1x1x1xf32>
      %168 = vector.extract %167[0, 0, 0] : f32 from vector<1x1x1xf32>
      %169 = arith.mulf %164, %164 : vector<8x8xf32>
      %170 = arith.mulf %169, %169 : vector<8x8xf32>
      %171 = vector.shape_cast %170 : vector<8x8xf32> to vector<1x8x8xf32>
      %cst_58 = arith.constant dense<0.000000e+00> : vector<1xf32>
      %172 = vector.multi_reduction <add>, %171, %cst_58 [1, 2] : vector<1x8x8xf32> to vector<1xf32>
      %173 = vector.shape_cast %172 : vector<1xf32> to vector<1x1x1xf32>
      %174 = vector.extract %173[0, 0, 0] : f32 from vector<1x1x1xf32>
      %175 = arith.addf %168, %174 : f32
      %cst_59 = arith.constant -1.250000e-01 : f32
      %176 = vector.broadcast %cst_59 : f32 to vector<8x8xf32>
      %177 = arith.mulf %176, %161 : vector<8x8xf32>
      %178 = math.exp %177 : vector<8x8xf32>
      %179 = vector.shape_cast %178 : vector<8x8xf32> to vector<1x8x8xf32>
      %cst_60 = arith.constant dense<0.000000e+00> : vector<1xf32>
      %180 = vector.multi_reduction <add>, %179, %cst_60 [1, 2] : vector<1x8x8xf32> to vector<1xf32>
      %181 = vector.shape_cast %180 : vector<1xf32> to vector<1x1x1xf32>
      %182 = vector.extract %181[0, 0, 0] : f32 from vector<1x1x1xf32>
      %183 = arith.addf %175, %182 : f32
      %184 = arith.mulf %178, %178 : vector<8x8xf32>
      %185 = arith.mulf %184, %184 : vector<8x8xf32>
      %186 = vector.shape_cast %185 : vector<8x8xf32> to vector<1x8x8xf32>
      %cst_61 = arith.constant dense<0.000000e+00> : vector<1xf32>
      %187 = vector.multi_reduction <add>, %186, %cst_61 [1, 2] : vector<1x8x8xf32> to vector<1xf32>
      %188 = vector.shape_cast %187 : vector<1xf32> to vector<1x1x1xf32>
      %189 = vector.extract %188[0, 0, 0] : f32 from vector<1x1x1xf32>
      %190 = arith.addf %183, %189 : f32
      %c0_62 = arith.constant 0 : index
      %c0_63 = arith.constant 0 : index
      %c0_64 = arith.constant 0 : index
      %191 = vector.load %arg12[%c0_62, %c0_63, %c0_64] : memref<1x8x128xf32, #tpu.memory_space<vmem>>, vector<1x8x128xf32>
      %c1_i32_65 = arith.constant 1 : i32
      %192 = vector.broadcast %c1_i32_65 : i32 to vector<1x8x128xi32>
      %193 = arith.cmpi eq, %124, %192 : vector<1x8x128xi32>
      %194 = arith.andi %127, %193 : vector<1x8x128xi1>
      %cst_66 = arith.constant 0.000000e+00 : f32
      %195 = vector.broadcast %190 : f32 to vector<1x8x128xf32>
      %196 = vector.broadcast %cst_66 : f32 to vector<1x8x128xf32>
      %197 = arith.select %194, %195, %196 : vector<1x8x128xi1>, vector<1x8x128xf32>
      %198 = arith.addf %191, %197 : vector<1x8x128xf32>
      %c0_67 = arith.constant 0 : index
      %c0_68 = arith.constant 0 : index
      %c0_69 = arith.constant 0 : index
      %199 = vector.load %arg12[%c0_67, %c0_68, %c0_69] : memref<1x8x128xf32, #tpu.memory_space<vmem>>, vector<1x8x128xf32>
      tpu.vector_store %arg12[%c0_67, %c0_68, %c0_69], %198 {strides = array<i32>} : memref<1x8x128xf32, #tpu.memory_space<vmem>>, vector<1x8x128xf32>,
    } else {
    }
    return
  }
  func.func @transform_0(%arg0: i32, %arg1: i32, %arg2: memref<1xi32, #tpu.memory_space<smem>>, %arg3: memref<1xi32, #tpu.memory_space<smem>>) -> (i32, i32) {
    %c1_i32 = arith.constant 1 : i32
    %0 = arith.muli %arg0, %c1_i32 : i32
    %1 = arith.addi %0, %arg1 : i32
    %2 = arith.index_cast %1 : i32 to index
    %3 = memref.load %arg2[%2] : memref<1xi32, #tpu.memory_space<smem>>
    %c0_i32 = arith.constant 0 : i32
    %c0_i32_0 = arith.constant 0 : i32
    return %3, %c0_i32 : i32, i32
  }
  func.func @transform_1(%arg0: i32, %arg1: i32, %arg2: memref<1xi32, #tpu.memory_space<smem>>, %arg3: memref<1xi32, #tpu.memory_space<smem>>) -> (i32, i32) {
    %c1_i32 = arith.constant 1 : i32
    %0 = arith.muli %arg0, %c1_i32 : i32
    %1 = arith.addi %0, %arg1 : i32
    %2 = arith.index_cast %1 : i32 to index
    %3 = memref.load %arg3[%2] : memref<1xi32, #tpu.memory_space<smem>>
    %c0_i32 = arith.constant 0 : i32
    %c0_i32_0 = arith.constant 0 : i32
    return %c0_i32, %3 : i32, i32
  }
  func.func @transform_2(%arg0: i32, %arg1: i32, %arg2: memref<1xi32, #tpu.memory_space<smem>>, %arg3: memref<1xi32, #tpu.memory_space<smem>>) -> (i32, i32) {
    %c1_i32 = arith.constant 1 : i32
    %0 = arith.muli %arg0, %c1_i32 : i32
    %1 = arith.addi %0, %arg1 : i32
    %2 = arith.index_cast %1 : i32 to index
    %3 = memref.load %arg2[%2] : memref<1xi32, #tpu.memory_space<smem>>
    %c0_i32 = arith.constant 0 : i32
    %c0_i32_0 = arith.constant 0 : i32
    return %3, %c0_i32 : i32, i32
  }
  func.func @transform_3(%arg0: i32, %arg1: i32, %arg2: memref<1xi32, #tpu.memory_space<smem>>, %arg3: memref<1xi32, #tpu.memory_space<smem>>) -> (i32, i32) {
    %c1_i32 = arith.constant 1 : i32
    %0 = arith.muli %arg0, %c1_i32 : i32
    %1 = arith.addi %0, %arg1 : i32
    %2 = arith.index_cast %1 : i32 to index
    %3 = memref.load %arg3[%2] : memref<1xi32, #tpu.memory_space<smem>>
    %c0_i32 = arith.constant 0 : i32
    %c0_i32_0 = arith.constant 0 : i32
    return %c0_i32, %3 : i32, i32
  }
  func.func @transform_4(%arg0: i32, %arg1: i32, %arg2: memref<1xi32, #tpu.memory_space<smem>>, %arg3: memref<1xi32, #tpu.memory_space<smem>>) -> (i32, i32) {
    %c1_i32 = arith.constant 1 : i32
    %0 = arith.muli %arg0, %c1_i32 : i32
    %1 = arith.addi %0, %arg1 : i32
    %2 = arith.index_cast %1 : i32 to index
    %3 = memref.load %arg2[%2] : memref<1xi32, #tpu.memory_space<smem>>
    %c0_i32 = arith.constant 0 : i32
    %c0_i32_0 = arith.constant 0 : i32
    return %3, %c0_i32 : i32, i32
  }
  func.func @transform_5(%arg0: i32, %arg1: i32, %arg2: memref<1xi32, #tpu.memory_space<smem>>, %arg3: memref<1xi32, #tpu.memory_space<smem>>) -> (i32, i32) {
    %c1_i32 = arith.constant 1 : i32
    %0 = arith.muli %arg0, %c1_i32 : i32
    %1 = arith.addi %0, %arg1 : i32
    %2 = arith.index_cast %1 : i32 to index
    %3 = memref.load %arg3[%2] : memref<1xi32, #tpu.memory_space<smem>>
    %c0_i32 = arith.constant 0 : i32
    %c0_i32_0 = arith.constant 0 : i32
    return %c0_i32, %3 : i32, i32
  }
  func.func @transform_6(%arg0: i32, %arg1: i32, %arg2: memref<1xi32, #tpu.memory_space<smem>>, %arg3: memref<1xi32, #tpu.memory_space<smem>>) -> (i32, i32) {
    %c1_i32 = arith.constant 1 : i32
    %0 = arith.muli %arg0, %c1_i32 : i32
    %1 = arith.addi %0, %arg1 : i32
    %2 = arith.index_cast %1 : i32 to index
    %3 = memref.load %arg2[%2] : memref<1xi32, #tpu.memory_space<smem>>
    %c0_i32 = arith.constant 0 : i32
    %c0_i32_0 = arith.constant 0 : i32
    return %3, %c0_i32 : i32, i32
  }
  func.func @transform_7(%arg0: i32, %arg1: i32, %arg2: memref<1xi32, #tpu.memory_space<smem>>, %arg3: memref<1xi32, #tpu.memory_space<smem>>) -> (i32, i32) {
    %c1_i32 = arith.constant 1 : i32
    %0 = arith.muli %arg0, %c1_i32 : i32
    %1 = arith.addi %0, %arg1 : i32
    %2 = arith.index_cast %1 : i32 to index
    %3 = memref.load %arg3[%2] : memref<1xi32, #tpu.memory_space<smem>>
    %c0_i32 = arith.constant 0 : i32
    %c0_i32_0 = arith.constant 0 : i32
    return %c0_i32, %3 : i32, i32
  }
  func.func @transform_8(%arg0: i32, %arg1: i32, %arg2: memref<1xi32, #tpu.memory_space<smem>>, %arg3: memref<1xi32, #tpu.memory_space<smem>>) -> (i32, i32, i32) {
    %c0_i32 = arith.constant 0 : i32
    %c0_i32_0 = arith.constant 0 : i32
    %c0_i32_1 = arith.constant 0 : i32
    return %arg0, %c0_i32, %c0_i32_0 : i32, i32, i32
  }
}

</mosaic_0001>

<llo_original>
// kernel: tpu_custom_call.1
$region0: #{tpu_custom_call.1}
  #allocation0 [shape = 'u32[]', space=smem, size = 0x4, offset = 0x4, fixed_abs, tag = 'smem constant byte address 0x4 - core index']
  #allocation1 [shape = 'u32[144,128]{1,0:T(1,128)}', space=vmem, size = 0x12000, scoped, tag = 'internal scratch']
  #allocation2 [shape = 's32[1]{0}', space=sflag, size = 0x4, scoped, tag = 'scoped memory for tpu_custom_call.1']
  #allocation3 [shape = 's32[1]{0:T(128)S(6)}', space=smem, size = 0x200, scoped, tag = 'prefetched SMEM operand 0']
  #allocation4 [shape = 's32[1]{0:T(128)S(6)}', space=smem, size = 0x200, scoped, tag = 'prefetched SMEM operand 1']
  %s0 = inlined_call_operand.<no memory space> [shape: s32[1], index: 0, kind: input, shape index: {}]
  %s1 = inlined_call_operand.<no memory space> [shape: s32[1], index: 1, kind: input, shape index: {}]
  %s2 = inlined_call_operand.vmem [shape: bf16[8,128], index: 2, kind: input, shape index: {}]
  %s3 = inlined_call_operand.vmem [shape: bf16[128,8], index: 3, kind: input, shape index: {}]
  %s4 = inlined_call_operand.vmem [shape: bf16[8,128], index: 4, kind: input, shape index: {}]
  %s5 = inlined_call_operand.vmem [shape: bf16[128,8], index: 5, kind: input, shape index: {}]
  %s6 = inlined_call_operand.vmem [shape: f32[8,1], index: 6, kind: input, shape index: {}]
  %s7 = inlined_call_operand.vmem [shape: f32[1,8], index: 7, kind: input, shape index: {}]
  %s8 = inlined_call_operand.vmem [shape: f32[8,1], index: 8, kind: input, shape index: {}]
  %s9 = inlined_call_operand.vmem [shape: f32[1,8], index: 9, kind: input, shape index: {}]
  %s10 = inlined_call_operand.hbm [shape: f32[1,8,128], index: 10, kind: output, shape index: {}]
  %s11 = sld [smem:[#allocation0]]
  $region50: #{tpu_custom_call.1} parent=0
    _
  %s13 = ssub.s32 1, %s11
  %s14 = scalar_select 0, %s13, %s11
  %15 = sst [smem:[#allocation3]] %s0
  %16 = sst [smem:[#allocation4]] %s1
  $region1: #{tpu_custom_call.1} parent=0
    #allocation5 [shape = 'u8[4096]{0}', space=vmem, size = 0x1000, scoped, tag = 'output window, operand 0, single buffered']
    #allocation6 [shape = 's32[1]{0}', space=sflag, size = 0x4, scoped, tag = 'scoped memory for tpu_custom_call.1']
    %17 = vsyncpa [#allocation6], 0
    // Predicated region
    $region2: #{tpu_custom_call.1} parent=1 // pred_check
      _
    $region3: #{tpu_custom_call.1} parent=1 // pred_check_branch
      %19 = sbr.rel (0) target = $region5
    $region4: #{tpu_custom_call.1} parent=1 // pred_region
      %s20 = sadd.s32 0, 0
      %s21 = sld [smem:[#allocation3 + %s20]]
      %p22 = scmp.lt.s32.totalorder %s21, 0
      %s23 = scalar_select %p22, %s21, 0
      %s24 = smul.addr %s23, 4
      %s25 = scalar_lea.vmem %s2, %s24
      %s26 = sadd.s32 0, 0
      %s27 = sld [smem:[#allocation3 + %s26]]
    $region5: #{tpu_custom_call.1} parent=1 // pred_fallthru
      _
    // Predicated region
    $region6: #{tpu_custom_call.1} parent=1 // pred_check
      _
    $region7: #{tpu_custom_call.1} parent=1 // pred_check_branch
      %29 = sbr.rel (0) target = $region9
    $region8: #{tpu_custom_call.1} parent=1 // pred_region
      %s30 = sadd.s32 0, 0
      %s31 = sld [smem:[#allocation4 + %s30]]
      %p32 = scmp.lt.s32.totalorder %s31, 0
      %s33 = scalar_select %p32, %s31, 0
      %s34 = smul.addr %s33, 4
      %s35 = scalar_lea.vmem %s3, %s34
      %s36 = sadd.s32 0, 0
      %s37 = sld [smem:[#allocation4 + %s36]]
    $region9: #{tpu_custom_call.1} parent=1 // pred_fallthru
      _
    // Predicated region
    $region10: #{tpu_custom_call.1} parent=1 // pred_check
      _
    $region11: #{tpu_custom_call.1} parent=1 // pred_check_branch
      %39 = sbr.rel (0) target = $region13
    $region12: #{tpu_custom_call.1} parent=1 // pred_region
      %s40 = sadd.s32 0, 0
      %s41 = sld [smem:[#allocation3 + %s40]]
      %p42 = scmp.lt.s32.totalorder %s41, 0
      %s43 = scalar_select %p42, %s41, 0
      %s44 = smul.addr %s43, 4
      %s45 = scalar_lea.vmem %s4, %s44
      %s46 = sadd.s32 0, 0
      %s47 = sld [smem:[#allocation3 + %s46]]
    $region13: #{tpu_custom_call.1} parent=1 // pred_fallthru
      _
    // Predicated region
    $region14: #{tpu_custom_call.1} parent=1 // pred_check
      _
    $region15: #{tpu_custom_call.1} parent=1 // pred_check_branch
      %49 = sbr.rel (0) target = $region17
    $region16: #{tpu_custom_call.1} parent=1 // pred_region
      %s50 = sadd.s32 0, 0
      %s51 = sld [smem:[#allocation4 + %s50]]
      %p52 = scmp.lt.s32.totalorder %s51, 0
      %s53 = scalar_select %p52, %s51, 0
      %s54 = smul.addr %s53, 4
      %s55 = scalar_lea.vmem %s5, %s54
      %s56 = sadd.s32 0, 0
      %s57 = sld [smem:[#allocation4 + %s56]]
    $region17: #{tpu_custom_call.1} parent=1 // pred_fallthru
      _
    // Predicated region
    $region18: #{tpu_custom_call.1} parent=1 // pred_check
      _
    $region19: #{tpu_custom_call.1} parent=1 // pred_check_branch
      %59 = sbr.rel (0) target = $region21
    $region20: #{tpu_custom_call.1} parent=1 // pred_region
      %s60 = sadd.s32 0, 0
      %s61 = sld [smem:[#allocation3 + %s60]]
      %p62 = scmp.lt.s32.totalorder %s61, 0
      %s63 = scalar_select %p62, %s61, 0
      %s64 = smul.addr %s63, 8
      %s65 = scalar_lea.vmem %s6, %s64
      %s66 = sadd.s32 0, 0
      %s67 = sld [smem:[#allocation3 + %s66]]
    $region21: #{tpu_custom_call.1} parent=1 // pred_fallthru
      _
    // Predicated region
    $region22: #{tpu_custom_call.1} parent=1 // pred_check
      _
    $region23: #{tpu_custom_call.1} parent=1 // pred_check_branch
      %69 = sbr.rel (0) target = $region25
    $region24: #{tpu_custom_call.1} parent=1 // pred_region
      %s70 = sadd.s32 0, 0
      %s71 = sld [smem:[#allocation4 + %s70]]
      %p72 = scmp.lt.s32.totalorder %s71, 0
      %s73 = scalar_select %p72, %s71, 0
      %s74 = scalar_lea.vmem %s7, %s73
      %s75 = sadd.s32 0, 0
      %s76 = sld [smem:[#allocation4 + %s75]]
    $region25: #{tpu_custom_call.1} parent=1 // pred_fallthru
      _
    // Predicated region
    $region26: #{tpu_custom_call.1} parent=1 // pred_check
      _
    $region27: #{tpu_custom_call.1} parent=1 // pred_check_branch
      %78 = sbr.rel (0) target = $region29
    $region28: #{tpu_custom_call.1} parent=1 // pred_region
      %s79 = sadd.s32 0, 0
      %s80 = sld [smem:[#allocation3 + %s79]]
      %p81 = scmp.lt.s32.totalorder %s80, 0
      %s82 = scalar_select %p81, %s80, 0
      %s83 = smul.addr %s82, 8
      %s84 = scalar_lea.vmem %s8, %s83
      %s85 = sadd.s32 0, 0
      %s86 = sld [smem:[#allocation3 + %s85]]
    $region29: #{tpu_custom_call.1} parent=1 // pred_fallthru
      _
    // Predicated region
    $region30: #{tpu_custom_call.1} parent=1 // pred_check
      _
    $region31: #{tpu_custom_call.1} parent=1 // pred_check_branch
      %88 = sbr.rel (0) target = $region33
    $region32: #{tpu_custom_call.1} parent=1 // pred_region
      %s89 = sadd.s32 0, 0
      %s90 = sld [smem:[#allocation4 + %s89]]
      %p91 = scmp.lt.s32.totalorder %s90, 0
      %s92 = scalar_select %p91, %s90, 0
      %s93 = scalar_lea.vmem %s9, %s92
      %s94 = sadd.s32 0, 0
      %s95 = sld [smem:[#allocation4 + %s94]]
    $region33: #{tpu_custom_call.1} parent=1 // pred_fallthru
      _
    %s96 = sadd.s32 0, 0
    %s97 = sld [smem:[#allocation3 + %s96]]
    %p98 = scmp.lt.s32.totalorder %s97, 0
    %s99 = scalar_select %p98, %s97, 0
    %s100 = smul.addr %s99, 4
    %s101 = scalar_lea.vmem %s2, %s100
    %s102 = sadd.s32 0, 0
    %s103 = sld [smem:[#allocation4 + %s102]]
    %p104 = scmp.lt.s32.totalorder %s103, 0
    %s105 = scalar_select %p104, %s103, 0
    %s106 = smul.addr %s105, 4
    %s107 = scalar_lea.vmem %s3, %s106
    %s108 = sadd.s32 0, 0
    %s109 = sld [smem:[#allocation3 + %s108]]
    %p110 = scmp.lt.s32.totalorder %s109, 0
    %s111 = scalar_select %p110, %s109, 0
    %s112 = smul.addr %s111, 4
    %s113 = scalar_lea.vmem %s4, %s112
    %s114 = sadd.s32 0, 0
    %s115 = sld [smem:[#allocation4 + %s114]]
    %p116 = scmp.lt.s32.totalorder %s115, 0
    %s117 = scalar_select %p116, %s115, 0
    %s118 = smul.addr %s117, 4
    %s119 = scalar_lea.vmem %s5, %s118
    %s120 = sadd.s32 0, 0
    %s121 = sld [smem:[#allocation3 + %s120]]
    %p122 = scmp.lt.s32.totalorder %s121, 0
    %s123 = scalar_select %p122, %s121, 0
    %s124 = smul.addr %s123, 8
    %s125 = scalar_lea.vmem %s6, %s124
    %s126 = sadd.s32 0, 0
    %s127 = sld [smem:[#allocation4 + %s126]]
    %p128 = scmp.lt.s32.totalorder %s127, 0
    %s129 = scalar_select %p128, %s127, 0
    %s130 = scalar_lea.vmem %s7, %s129
    %s131 = sadd.s32 0, 0
    %s132 = sld [smem:[#allocation3 + %s131]]
    %p133 = scmp.lt.s32.totalorder %s132, 0
    %s134 = scalar_select %p133, %s132, 0
    %s135 = smul.addr %s134, 8
    %s136 = scalar_lea.vmem %s8, %s135
    %s137 = sadd.s32 0, 0
    %s138 = sld [smem:[#allocation4 + %s137]]
    %p139 = scmp.lt.s32.totalorder %s138, 0
    %s140 = scalar_select %p139, %s138, 0
    %s141 = scalar_lea.vmem %s9, %s140
    %s142 = sadd.s32 0, 0
    %s143 = sld [smem:[#allocation3 + %s142]]
    %p144 = scmp.lt.s32.totalorder %s143, 0
    %s145 = scalar_select %p144, %s143, 0
    %s146 = smul.addr %s145, 4
    %s147 = scalar_lea.vmem %s2, %s146
    %s148 = sadd.s32 0, 0
    %s149 = sld [smem:[#allocation3 + %s148]]
    %s150 = sadd.s32 0, 0
    %s151 = sld [smem:[#allocation4 + %s150]]
    %p152 = scmp.lt.s32.totalorder %s151, 0
    %s153 = scalar_select %p152, %s151, 0
    %s154 = smul.addr %s153, 4
    %s155 = scalar_lea.vmem %s3, %s154
    %s156 = sadd.s32 0, 0
    %s157 = sld [smem:[#allocation4 + %s156]]
    %s158 = sadd.s32 0, 0
    %s159 = sld [smem:[#allocation3 + %s158]]
    %p160 = scmp.lt.s32.totalorder %s159, 0
    %s161 = scalar_select %p160, %s159, 0
    %s162 = smul.addr %s161, 4
    %s163 = scalar_lea.vmem %s4, %s162
    %s164 = sadd.s32 0, 0
    %s165 = sld [smem:[#allocation3 + %s164]]
    %s166 = sadd.s32 0, 0
    %s167 = sld [smem:[#allocation4 + %s166]]
    %p168 = scmp.lt.s32.totalorder %s167, 0
    %s169 = scalar_select %p168, %s167, 0
    %s170 = smul.addr %s169, 4
    %s171 = scalar_lea.vmem %s5, %s170
    %s172 = sadd.s32 0, 0
    %s173 = sld [smem:[#allocation4 + %s172]]
    %s174 = sadd.s32 0, 0
    %s175 = sld [smem:[#allocation3 + %s174]]
    %p176 = scmp.lt.s32.totalorder %s175, 0
    %s177 = scalar_select %p176, %s175, 0
    %s178 = smul.addr %s177, 8
    %s179 = scalar_lea.vmem %s6, %s178
    %s180 = sadd.s32 0, 0
    %s181 = sld [smem:[#allocation3 + %s180]]
    %s182 = sadd.s32 0, 0
    %s183 = sld [smem:[#allocation4 + %s182]]
    %p184 = scmp.lt.s32.totalorder %s183, 0
    %s185 = scalar_select %p184, %s183, 0
    %s186 = scalar_lea.vmem %s7, %s185
    %s187 = sadd.s32 0, 0
    %s188 = sld [smem:[#allocation4 + %s187]]
    %s189 = sadd.s32 0, 0
    %s190 = sld [smem:[#allocation3 + %s189]]
    %p191 = scmp.lt.s32.totalorder %s190, 0
    %s192 = scalar_select %p191, %s190, 0
    %s193 = smul.addr %s192, 8
    %s194 = scalar_lea.vmem %s8, %s193
    %s195 = sadd.s32 0, 0
    %s196 = sld [smem:[#allocation3 + %s195]]
    %s197 = sadd.s32 0, 0
    %s198 = sld [smem:[#allocation4 + %s197]]
    %p199 = scmp.lt.s32.totalorder %s198, 0
    %s200 = scalar_select %p199, %s198, 0
    %s201 = scalar_lea.vmem %s9, %s200
    %s202 = sadd.s32 0, 0
    %s203 = sld [smem:[#allocation4 + %s202]]
    %s205 = sadd.s32 0, 0
    %s206 = sld [smem:[#allocation3 + %s205]]
    %s207 = sld [smem:[#allocation4 + %s205]]
    %p208 = scmp.lt.s32.totalorder %s205, 1
    %p209 = scmp.gt.s32.totalorder %s207, %s206
    %p210 = scmp.eq.s32.totalorder 0, 0
    // Predicated region
    $region34: #{tpu_custom_call.1} parent=1 // pred_check
      %p211 = pneg %p210
    $region35: #{tpu_custom_call.1} parent=1 // pred_check_branch
      %213 = sbr.rel (%p211) target = $region37
    $region36: #{tpu_custom_call.1} parent=1 // pred_region
      %214 = vst [vmem:[#allocation5] sm:$0xff] 0.0
    $region37: #{tpu_custom_call.1} parent=1 // pred_fallthru
      _
    %v215 = vld [vmem:[%s147] sm:$0xf]
    %v216 = vld [vmem:[%s163] sm:$0xf]
    %v217 = vld [vmem:[%s155] sm:$0xf]
    %v218 = vld [vmem:[%s155 + $0x4] sm:$0xf]
    %v219 = vld [vmem:[%s155 + $0x8] sm:$0xf]
    %v220 = vld [vmem:[%s155 + $0xc] sm:$0xf]
    %v221 = vld [vmem:[%s155 + $0x10] sm:$0xf]
    %v222 = vld [vmem:[%s155 + $0x14] sm:$0xf]
    %v223 = vld [vmem:[%s155 + $0x18] sm:$0xf]
    %v224 = vld [vmem:[%s155 + $0x1c] sm:$0xf]
    %v225 = vld [vmem:[%s155 + $0x20] sm:$0xf]
    %v226 = vld [vmem:[%s155 + $0x24] sm:$0xf]
    %v227 = vld [vmem:[%s155 + $0x28] sm:$0xf]
    %v228 = vld [vmem:[%s155 + $0x2c] sm:$0xf]
    %v229 = vld [vmem:[%s155 + $0x30] sm:$0xf]
    %v230 = vld [vmem:[%s155 + $0x34] sm:$0xf]
    %v231 = vld [vmem:[%s155 + $0x38] sm:$0xf]
    %v232 = vld [vmem:[%s155 + $0x3c] sm:$0xf]
    %v233 = vld [vmem:[%s171] sm:$0xf]
    %v234 = vld [vmem:[%s171 + $0x4] sm:$0xf]
    %v235 = vld [vmem:[%s171 + $0x8] sm:$0xf]
    %v236 = vld [vmem:[%s171 + $0xc] sm:$0xf]
    %v237 = vld [vmem:[%s171 + $0x10] sm:$0xf]
    %v238 = vld [vmem:[%s171 + $0x14] sm:$0xf]
    %v239 = vld [vmem:[%s171 + $0x18] sm:$0xf]
    %v240 = vld [vmem:[%s171 + $0x1c] sm:$0xf]
    %v241 = vld [vmem:[%s171 + $0x20] sm:$0xf]
    %v242 = vld [vmem:[%s171 + $0x24] sm:$0xf]
    %v243 = vld [vmem:[%s171 + $0x28] sm:$0xf]
    %v244 = vld [vmem:[%s171 + $0x2c] sm:$0xf]
    %v245 = vld [vmem:[%s171 + $0x30] sm:$0xf]
    %v246 = vld [vmem:[%s171 + $0x34] sm:$0xf]
    %v247 = vld [vmem:[%s171 + $0x38] sm:$0xf]
    %v248 = vld [vmem:[%s171 + $0x3c] sm:$0xf]
    %v249 = vld [vmem:[%s179] sm:$0xff]
    %v250 = vld [vmem:[%s186] sm:$0x1]
    %v251 = vld [vmem:[%s194] sm:$0xff]
    %v252 = vld [vmem:[%s201] sm:$0x1]
    %v269 = vunpack.c.l.b16 %v217
    %v270 = vunpack.c.l.b16 %v218
    %v271 = vunpack.c.l.b16 %v219
    %v272 = vunpack.c.l.b16 %v220
    %v273 = vunpack.c.l.b16 %v221
    %v274 = vunpack.c.l.b16 %v222
    %v275 = vunpack.c.l.b16 %v223
    %v276 = vunpack.c.l.b16 %v224
    %v277 = vunpack.c.l.b16 %v225
    %v278 = vunpack.c.l.b16 %v226
    %v279 = vunpack.c.l.b16 %v227
    %v280 = vunpack.c.l.b16 %v228
    %v281 = vunpack.c.l.b16 %v229
    %v282 = vunpack.c.l.b16 %v230
    %v283 = vunpack.c.l.b16 %v231
    %v284 = vunpack.c.l.b16 %v232
    %v285 = vpack.c.b16 %v270, %v269
    %v286 = vpack.c.b16 %v272, %v271
    %v287 = vpack.c.b16 %v274, %v273
    %v288 = vpack.c.b16 %v276, %v275
    %v289 = vpack.c.b16 %v278, %v277
    %v290 = vpack.c.b16 %v280, %v279
    %v291 = vpack.c.b16 %v282, %v281
    %v292 = vpack.c.b16 %v284, %v283
    %301 = vmatprep.subr.bf16.mxu0 0
    %302 = vmatpush1.bf16.msra.mxu0 %v285
    %303 = vmatprep.subr.bf16.mxu0 0
    %304 = vmatpush1.bf16.msra.mxu0 %v286
    %305 = vmatprep.subr.bf16.mxu0 0
    %306 = vmatpush1.bf16.msra.mxu0 %v287
    %307 = vmatprep.subr.bf16.mxu0 0
    %308 = vmatpush1.bf16.msra.mxu0 %v288
    %309 = vmatprep.subr.bf16.mxu0 0
    %310 = vmatpush1.bf16.msra.mxu0 %v289
    %311 = vmatprep.subr.bf16.mxu0 0
    %312 = vmatpush1.bf16.msra.mxu0 %v290
    %313 = vmatprep.subr.bf16.mxu0 0
    %314 = vmatpush1.bf16.msra.mxu0 %v291
    %315 = vmatprep.subr.bf16.mxu0 0
    %316 = vmatpush1.bf16.msra.mxu0 %v292
    %317 = vmatprep.subr.bf16.mxu0 0
    %318 = vmatpush1.bf16.msra.mxu0 0
    %319 = vmatprep.subr.bf16.mxu0 0
    %320 = vmatpush1.bf16.msra.mxu0 0
    %321 = vmatprep.subr.bf16.mxu0 0
    %322 = vmatpush1.bf16.msra.mxu0 0
    %323 = vmatprep.subr.bf16.mxu0 0
    %324 = vmatpush1.bf16.msra.mxu0 0
    %325 = vmatprep.subr.bf16.mxu0 0
    %326 = vmatpush1.bf16.msra.mxu0 0
    %327 = vmatprep.subr.bf16.mxu0 0
    %328 = vmatpush1.bf16.msra.mxu0 0
    %329 = vmatprep.subr.bf16.mxu0 0
    %330 = vmatpush1.bf16.msra.mxu0 0
    %331 = vmatprep.subr.bf16.mxu0 0
    %332 = vmatpush1.bf16.msra.mxu0 0
    %333 = vmatprep.mubr.bf16.mxu0 0
    %334 = vmatmul.mubr.bf16.gmra.mrb[0].mxu0 %v215
    %v335 = vpop.f32.mrb[0].mxu0
    %v336 = vadd.f32 0.0, %v335
    %v337 = vpop.f32.mrb[0].mxu0
    %v338 = vpop.f32.mrb[0].mxu0
    %v339 = vpop.f32.mrb[0].mxu0
    %340 = vdwg.mxu0
    %342 = vset.pattern.permute.xlu0 0
    %343 = vperm.xlu0 %342, %v249
    %v344 = vpop.permute.xlu0 %343
    %v346 = vsub.f32 %v344, %v336
    %v348 = vlaneseq
    %v349 = vshrl.u32 %v348, 7
    %v350 = vsub.s32 0, %v349
    %v351 = vrot.slane %v250, %v350
    %v353 = vadd.f32 %v346, %v351
    %v354 = vmul.f32 %v353, -0.0078125
    %v355 = vmul.f32 %v354, 1.442695
    %v356 = vpow.pop %v355
    %vm357 = vcmask 64512
    %v358 = vsel %vm357, %v356, 0.0
    %359 = vadd.xlane.f32.xlu0 %v358
    %v360 = vpop.xlane.xlu0 %359
    %v361 = vrot.slane %v360, 4
    %v362 = vadd.f32 %v360, %v361
    %v363 = vrot.slane %v362, 2
    %v364 = vadd.f32 %v362, %v363
    %v365 = vrot.slane %v364, 1
    %v366 = vadd.f32 %v364, %v365
    %s367 = vtos %v366
    %v368 = vmul.f32 %v356, %v356
    %v369 = vmul.f32 %v368, %v368
    %v370 = vsel %vm357, %v369, 0.0
    %371 = vadd.xlane.f32.xlu0 %v370
    %v372 = vpop.xlane.xlu0 %371
    %v373 = vrot.slane %v372, 4
    %v374 = vadd.f32 %v372, %v373
    %v375 = vrot.slane %v374, 2
    %v376 = vadd.f32 %v374, %v375
    %v377 = vrot.slane %v376, 1
    %v378 = vadd.f32 %v376, %v377
    %s379 = vtos %v378
    %s380 = sadd.f32 %s367, %s379
    %v381 = vmul.f32 %v353, -0.125
    %v382 = vmul.f32 %v381, 1.442695
    %v383 = vpow.pop %v382
    %v384 = vsel %vm357, %v383, 0.0
    %385 = vadd.xlane.f32.xlu0 %v384
    %v386 = vpop.xlane.xlu0 %385
    %v387 = vrot.slane %v386, 4
    %v388 = vadd.f32 %v386, %v387
    %v389 = vrot.slane %v388, 2
    %v390 = vadd.f32 %v388, %v389
    %v391 = vrot.slane %v390, 1
    %v392 = vadd.f32 %v390, %v391
    %s393 = vtos %v392
    %s394 = sadd.f32 %s380, %s393
    %v395 = vmul.f32 %v383, %v383
    %v396 = vmul.f32 %v395, %v395
    %v397 = vsel %vm357, %v396, 0.0
    %398 = vadd.xlane.f32.xlu0 %v397
    %v399 = vpop.xlane.xlu0 %398
    %v400 = vrot.slane %v399, 4
    %v401 = vadd.f32 %v399, %v400
    %v402 = vrot.slane %v401, 2
    %v403 = vadd.f32 %v401, %v402
    %v404 = vrot.slane %v403, 1
    %v405 = vadd.f32 %v403, %v404
    %s406 = vtos %v405
    %s407 = sadd.f32 %s394, %s406
    %v424 = vunpack.c.l.b16 %v233
    %v425 = vunpack.c.l.b16 %v234
    %v426 = vunpack.c.l.b16 %v235
    %v427 = vunpack.c.l.b16 %v236
    %v428 = vunpack.c.l.b16 %v237
    %v429 = vunpack.c.l.b16 %v238
    %v430 = vunpack.c.l.b16 %v239
    %v431 = vunpack.c.l.b16 %v240
    %v432 = vunpack.c.l.b16 %v241
    %v433 = vunpack.c.l.b16 %v242
    %v434 = vunpack.c.l.b16 %v243
    %v435 = vunpack.c.l.b16 %v244
    %v436 = vunpack.c.l.b16 %v245
    %v437 = vunpack.c.l.b16 %v246
    %v438 = vunpack.c.l.b16 %v247
    %v439 = vunpack.c.l.b16 %v248
    %v440 = vpack.c.b16 %v425, %v424
    %v441 = vpack.c.b16 %v427, %v426
    %v442 = vpack.c.b16 %v429, %v428
    %v443 = vpack.c.b16 %v431, %v430
    %v444 = vpack.c.b16 %v433, %v432
    %v445 = vpack.c.b16 %v435, %v434
    %v446 = vpack.c.b16 %v437, %v436
    %v447 = vpack.c.b16 %v439, %v438
    %456 = vmatprep.subr.bf16.mxu0 0
    %457 = vmatpush1.bf16.msra.mxu0 %v440
    %458 = vmatprep.subr.bf16.mxu0 0
    %459 = vmatpush1.bf16.msra.mxu0 %v441
    %460 = vmatprep.subr.bf16.mxu0 0
    %461 = vmatpush1.bf16.msra.mxu0 %v442
    %462 = vmatprep.subr.bf16.mxu0 0
    %463 = vmatpush1.bf16.msra.mxu0 %v443
    %464 = vmatprep.subr.bf16.mxu0 0
    %465 = vmatpush1.bf16.msra.mxu0 %v444
    %466 = vmatprep.subr.bf16.mxu0 0
    %467 = vmatpush1.bf16.msra.mxu0 %v445
    %468 = vmatprep.subr.bf16.mxu0 0
    %469 = vmatpush1.bf16.msra.mxu0 %v446
    %470 = vmatprep.subr.bf16.mxu0 0
    %471 = vmatpush1.bf16.msra.mxu0 %v447
    %472 = vmatprep.subr.bf16.mxu0 0
    %473 = vmatpush1.bf16.msra.mxu0 0
    %474 = vmatprep.subr.bf16.mxu0 0
    %475 = vmatpush1.bf16.msra.mxu0 0
    %476 = vmatprep.subr.bf16.mxu0 0
    %477 = vmatpush1.bf16.msra.mxu0 0
    %478 = vmatprep.subr.bf16.mxu0 0
    %479 = vmatpush1.bf16.msra.mxu0 0
    %480 = vmatprep.subr.bf16.mxu0 0
    %481 = vmatpush1.bf16.msra.mxu0 0
    %482 = vmatprep.subr.bf16.mxu0 0
    %483 = vmatpush1.bf16.msra.mxu0 0
    %484 = vmatprep.subr.bf16.mxu0 0
    %485 = vmatpush1.bf16.msra.mxu0 0
    %486 = vmatprep.subr.bf16.mxu0 0
    %487 = vmatpush1.bf16.msra.mxu0 0
    %488 = vmatprep.mubr.bf16.mxu0 0
    %489 = vmatmul.mubr.bf16.gmra.mrb[0].mxu0 %v215
    %v490 = vpop.f32.mrb[0].mxu0
    %v491 = vadd.f32 0.0, %v490
    %v492 = vpop.f32.mrb[0].mxu0
    %v493 = vpop.f32.mrb[0].mxu0
    %v494 = vpop.f32.mrb[0].mxu0
    %495 = vdwg.mxu0
    %v496 = vsub.f32 %v344, %v491
    %v498 = vlaneseq
    %v499 = vshrl.u32 %v498, 7
    %v500 = vsub.s32 0, %v499
    %v501 = vrot.slane %v252, %v500
    %v503 = vadd.f32 %v496, %v501
    %v504 = vmul.f32 %v503, -0.0078125
    %v505 = vmul.f32 %v504, 1.442695
    %v506 = vpow.pop %v505
    %v507 = vsel %vm357, %v506, 0.0
    %508 = vadd.xlane.f32.xlu0 %v507
    %v509 = vpop.xlane.xlu0 %508
    %v510 = vrot.slane %v509, 4
    %v511 = vadd.f32 %v509, %v510
    %v512 = vrot.slane %v511, 2
    %v513 = vadd.f32 %v511, %v512
    %v514 = vrot.slane %v513, 1
    %v515 = vadd.f32 %v513, %v514
    %s516 = vtos %v515
    %v517 = vmul.f32 %v506, %v506
    %v518 = vmul.f32 %v517, %v517
    %v519 = vsel %vm357, %v518, 0.0
    %520 = vadd.xlane.f32.xlu0 %v519
    %v521 = vpop.xlane.xlu0 %520
    %v522 = vrot.slane %v521, 4
    %v523 = vadd.f32 %v521, %v522
    %v524 = vrot.slane %v523, 2
    %v525 = vadd.f32 %v523, %v524
    %v526 = vrot.slane %v525, 1
    %v527 = vadd.f32 %v525, %v526
    %s528 = vtos %v527
    %s529 = sadd.f32 %s516, %s528
    %v530 = vmul.f32 %v503, -0.125
    %v531 = vmul.f32 %v530, 1.442695
    %v532 = vpow.pop %v531
    %v533 = vsel %vm357, %v532, 0.0
    %534 = vadd.xlane.f32.xlu0 %v533
    %v535 = vpop.xlane.xlu0 %534
    %v536 = vrot.slane %v535, 4
    %v537 = vadd.f32 %v535, %v536
    %v538 = vrot.slane %v537, 2
    %v539 = vadd.f32 %v537, %v538
    %v540 = vrot.slane %v539, 1
    %v541 = vadd.f32 %v539, %v540
    %s542 = vtos %v541
    %s543 = sadd.f32 %s529, %s542
    %v544 = vmul.f32 %v532, %v532
    %v545 = vmul.f32 %v544, %v544
    %v546 = vsel %vm357, %v545, 0.0
    %547 = vadd.xlane.f32.xlu0 %v546
    %v548 = vpop.xlane.xlu0 %547
    %v549 = vrot.slane %v548, 4
    %v550 = vadd.f32 %v548, %v549
    %v551 = vrot.slane %v550, 2
    %v552 = vadd.f32 %v550, %v551
    %v553 = vrot.slane %v552, 1
    %v554 = vadd.f32 %v552, %v553
    %s555 = vtos %v554
    %s556 = sadd.f32 %s543, %s555
    %557 = vmatprep.subr.bf16.mxu0 0
    %558 = vmatpush1.bf16.msra.mxu0 %v440
    %559 = vmatprep.subr.bf16.mxu0 0
    %560 = vmatpush1.bf16.msra.mxu0 %v441
    %561 = vmatprep.subr.bf16.mxu0 0
    %562 = vmatpush1.bf16.msra.mxu0 %v442
    %563 = vmatprep.subr.bf16.mxu0 0
    %564 = vmatpush1.bf16.msra.mxu0 %v443
    %565 = vmatprep.subr.bf16.mxu0 0
    %566 = vmatpush1.bf16.msra.mxu0 %v444
    %567 = vmatprep.subr.bf16.mxu0 0
    %568 = vmatpush1.bf16.msra.mxu0 %v445
    %569 = vmatprep.subr.bf16.mxu0 0
    %570 = vmatpush1.bf16.msra.mxu0 %v446
    %571 = vmatprep.subr.bf16.mxu0 0
    %572 = vmatpush1.bf16.msra.mxu0 %v447
    %573 = vmatprep.subr.bf16.mxu0 0
    %574 = vmatpush1.bf16.msra.mxu0 0
    %575 = vmatprep.subr.bf16.mxu0 0
    %576 = vmatpush1.bf16.msra.mxu0 0
    %577 = vmatprep.subr.bf16.mxu0 0
    %578 = vmatpush1.bf16.msra.mxu0 0
    %579 = vmatprep.subr.bf16.mxu0 0
    %580 = vmatpush1.bf16.msra.mxu0 0
    %581 = vmatprep.subr.bf16.mxu0 0
    %582 = vmatpush1.bf16.msra.mxu0 0
    %583 = vmatprep.subr.bf16.mxu0 0
    %584 = vmatpush1.bf16.msra.mxu0 0
    %585 = vmatprep.subr.bf16.mxu0 0
    %586 = vmatpush1.bf16.msra.mxu0 0
    %587 = vmatprep.subr.bf16.mxu0 0
    %588 = vmatpush1.bf16.msra.mxu0 0
    %589 = vmatprep.mubr.bf16.mxu0 0
    %590 = vmatmul.mubr.bf16.gmra.mrb[0].mxu0 %v216
    %v591 = vpop.f32.mrb[0].mxu0
    %v592 = vadd.f32 0.0, %v591
    %v593 = vpop.f32.mrb[0].mxu0
    %v594 = vpop.f32.mrb[0].mxu0
    %v595 = vpop.f32.mrb[0].mxu0
    %596 = vdwg.mxu0
    %598 = vset.pattern.permute.xlu0 0
    %599 = vperm.xlu0 %598, %v251
    %v600 = vpop.permute.xlu0 %599
    %v602 = vsub.f32 %v600, %v592
    %v603 = vadd.f32 %v602, %v501
    %v604 = vmul.f32 %v603, -0.0078125
    %v605 = vmul.f32 %v604, 1.442695
    %v606 = vpow.pop %v605
    %v607 = vsel %vm357, %v606, 0.0
    %608 = vadd.xlane.f32.xlu0 %v607
    %v609 = vpop.xlane.xlu0 %608
    %v610 = vrot.slane %v609, 4
    %v611 = vadd.f32 %v609, %v610
    %v612 = vrot.slane %v611, 2
    %v613 = vadd.f32 %v611, %v612
    %v614 = vrot.slane %v613, 1
    %v615 = vadd.f32 %v613, %v614
    %s616 = vtos %v615
    %v617 = vmul.f32 %v606, %v606
    %v618 = vmul.f32 %v617, %v617
    %v619 = vsel %vm357, %v618, 0.0
    %620 = vadd.xlane.f32.xlu0 %v619
    %v621 = vpop.xlane.xlu0 %620
    %v622 = vrot.slane %v621, 4
    %v623 = vadd.f32 %v621, %v622
    %v624 = vrot.slane %v623, 2
    %v625 = vadd.f32 %v623, %v624
    %v626 = vrot.slane %v625, 1
    %v627 = vadd.f32 %v625, %v626
    %s628 = vtos %v627
    %s629 = sadd.f32 %s616, %s628
    %v630 = vmul.f32 %v603, -0.125
    %v631 = vmul.f32 %v630, 1.442695
    %v632 = vpow.pop %v631
    %v633 = vsel %vm357, %v632, 0.0
    %634 = vadd.xlane.f32.xlu0 %v633
    %v635 = vpop.xlane.xlu0 %634
    %v636 = vrot.slane %v635, 4
    %v637 = vadd.f32 %v635, %v636
    %v638 = vrot.slane %v637, 2
    %v639 = vadd.f32 %v637, %v638
    %v640 = vrot.slane %v639, 1
    %v641 = vadd.f32 %v639, %v640
    %s642 = vtos %v641
    %s643 = sadd.f32 %s629, %s642
    %v644 = vmul.f32 %v632, %v632
    %v645 = vmul.f32 %v644, %v644
    %v646 = vsel %vm357, %v645, 0.0
    %647 = vadd.xlane.f32.xlu0 %v646
    %v648 = vpop.xlane.xlu0 %647
    %v649 = vrot.slane %v648, 4
    %v650 = vadd.f32 %v648, %v649
    %v651 = vrot.slane %v650, 2
    %v652 = vadd.f32 %v650, %v651
    %v653 = vrot.slane %v652, 1
    %v654 = vadd.f32 %v652, %v653
    %s655 = vtos %v654
    %s656 = sadd.f32 %s643, %s655
    %s657 = scalar_select %p209, 2.0, 1.0
    %s658 = scalar_select %p208, %s657, 0.0
    %s659 = scalar_select %p208, 1.0, 0.0
    %v660 = vlaneseq
    %v661 = vand.u32 %v660, 127
    %v662 = vlaneseq
    %v663 = vshrl.u32 %v662, 7
    %vm664 = vcmp.eq.s32.totalorder %v663, 0
    %v665 = vld [vmem:[#allocation5] sm:$0xff]
    %vm666 = vcmp.eq.s32.totalorder %v661, 0
    %vm667 = vmand %vm664, %vm666
    %s668 = smul.f32 %s658, %s407
    %v669 = vstv %s668
    %v670 = vsel %vm667, %v669, 0.0
    %vm671 = vcmp.eq.s32.totalorder %v661, 1
    %vm672 = vmand %vm664, %vm671
    %s673 = smul.f32 %s659, %s556
    %v674 = vstv %s673
    %v675 = vsel %vm672, %v674, 0.0
    %v676 = vadd.f32 %v670, %v675
    %vm677 = vcmp.eq.s32.totalorder %v661, 2
    %vm678 = vmand %vm664, %vm677
    %s679 = smul.f32 %s658, %s656
    %v680 = vstv %s679
    %v681 = vsel %vm678, %v680, 0.0
    %v682 = vadd.f32 %v676, %v681
    %v683 = vadd.f32 %v665, %v682
    %684 = vst [vmem:[#allocation5] sm:$0xff] %v683
    %p685 = pnand %p208, %p209
    %p686 = pneg %p685
    // Predicated region
    $region38: #{tpu_custom_call.1} parent=1 // pred_check
      _
    $region39: #{tpu_custom_call.1} parent=1 // pred_check_branch
      %688 = sbr.rel (%p685) target = $region41
    $region40: #{tpu_custom_call.1} parent=1 // pred_region
      %689 = vmatprep.subr.bf16.mxu0 0
      %690 = vmatpush1.bf16.msra.mxu0 %v285
      %691 = vmatprep.subr.bf16.mxu0 0
      %692 = vmatpush1.bf16.msra.mxu0 %v286
      %693 = vmatprep.subr.bf16.mxu0 0
      %694 = vmatpush1.bf16.msra.mxu0 %v287
      %695 = vmatprep.subr.bf16.mxu0 0
      %696 = vmatpush1.bf16.msra.mxu0 %v288
      %697 = vmatprep.subr.bf16.mxu0 0
      %698 = vmatpush1.bf16.msra.mxu0 %v289
      %699 = vmatprep.subr.bf16.mxu0 0
      %700 = vmatpush1.bf16.msra.mxu0 %v290
      %701 = vmatprep.subr.bf16.mxu0 0
      %702 = vmatpush1.bf16.msra.mxu0 %v291
      %703 = vmatprep.subr.bf16.mxu0 0
      %704 = vmatpush1.bf16.msra.mxu0 %v292
      %705 = vmatprep.subr.bf16.mxu0 0
      %706 = vmatpush1.bf16.msra.mxu0 0
      %707 = vmatprep.subr.bf16.mxu0 0
      %708 = vmatpush1.bf16.msra.mxu0 0
      %709 = vmatprep.subr.bf16.mxu0 0
      %710 = vmatpush1.bf16.msra.mxu0 0
      %711 = vmatprep.subr.bf16.mxu0 0
      %712 = vmatpush1.bf16.msra.mxu0 0
      %713 = vmatprep.subr.bf16.mxu0 0
      %714 = vmatpush1.bf16.msra.mxu0 0
      %715 = vmatprep.subr.bf16.mxu0 0
      %716 = vmatpush1.bf16.msra.mxu0 0
      %717 = vmatprep.subr.bf16.mxu0 0
      %718 = vmatpush1.bf16.msra.mxu0 0
      %719 = vmatprep.subr.bf16.mxu0 0
      %720 = vmatpush1.bf16.msra.mxu0 0
      %721 = vmatprep.mubr.bf16.mxu0 0
      %722 = vmatmul.mubr.bf16.gmra.mrb[0].mxu0 %v216
      %v723 = vpop.f32.mrb[0].mxu0
      %v724 = vadd.f32 0.0, %v723
      %v725 = vpop.f32.mrb[0].mxu0
      %v726 = vpop.f32.mrb[0].mxu0
      %v727 = vpop.f32.mrb[0].mxu0
      %728 = vdwg.mxu0
      %v729 = vsub.f32 %v600, %v724
      %v730 = vadd.f32 %v729, %v351
      %v731 = vmul.f32 %v730, -0.0078125
      %v732 = vmul.f32 %v731, 1.442695
      %v733 = vpow.pop %v732
      %v734 = vsel %vm357, %v733, 0.0
      %735 = vadd.xlane.f32.xlu0 %v734
      %v736 = vpop.xlane.xlu0 %735
      %v737 = vrot.slane %v736, 4
      %v738 = vadd.f32 %v736, %v737
      %v739 = vrot.slane %v738, 2
      %v740 = vadd.f32 %v738, %v739
      %v741 = vrot.slane %v740, 1
      %v742 = vadd.f32 %v740, %v741
      %s743 = vtos %v742
      %v744 = vmul.f32 %v733, %v733
      %v745 = vmul.f32 %v744, %v744
      %v746 = vsel %vm357, %v745, 0.0
      %747 = vadd.xlane.f32.xlu0 %v746
      %v748 = vpop.xlane.xlu0 %747
      %v749 = vrot.slane %v748, 4
      %v750 = vadd.f32 %v748, %v749
      %v751 = vrot.slane %v750, 2
      %v752 = vadd.f32 %v750, %v751
      %v753 = vrot.slane %v752, 1
      %v754 = vadd.f32 %v752, %v753
      %s755 = vtos %v754
      %s756 = sadd.f32 %s743, %s755
      %v757 = vmul.f32 %v730, -0.125
      %v758 = vmul.f32 %v757, 1.442695
      %v759 = vpow.pop %v758
      %v760 = vsel %vm357, %v759, 0.0
      %761 = vadd.xlane.f32.xlu0 %v760
      %v762 = vpop.xlane.xlu0 %761
      %v763 = vrot.slane %v762, 4
      %v764 = vadd.f32 %v762, %v763
      %v765 = vrot.slane %v764, 2
      %v766 = vadd.f32 %v764, %v765
      %v767 = vrot.slane %v766, 1
      %v768 = vadd.f32 %v766, %v767
      %s769 = vtos %v768
      %s770 = sadd.f32 %s756, %s769
      %v771 = vmul.f32 %v759, %v759
      %v772 = vmul.f32 %v771, %v771
      %v773 = vsel %vm357, %v772, 0.0
      %774 = vadd.xlane.f32.xlu0 %v773
      %v775 = vpop.xlane.xlu0 %774
      %v776 = vrot.slane %v775, 4
      %v777 = vadd.f32 %v775, %v776
      %v778 = vrot.slane %v777, 2
      %v779 = vadd.f32 %v777, %v778
      %v780 = vrot.slane %v779, 1
      %v781 = vadd.f32 %v779, %v780
      %s782 = vtos %v781
      %s783 = sadd.f32 %s770, %s782
      %v784 = vld [vmem:[#allocation5] sm:$0xff]
      %v785 = vstv %s783
      %v786 = vsel %vm672, %v785, 0.0
      %v787 = vadd.f32 %v784, %v786
      %788 = vst [vmem:[#allocation5] sm:$0xff] %v787
    $region41: #{tpu_custom_call.1} parent=1 // pred_fallthru
      _
    // Predicated region
    $region42: #{tpu_custom_call.1} parent=1 // pred_check
      _
    $region43: #{tpu_custom_call.1} parent=1 // pred_check_branch
      %790 = sbr.rel (0) target = $region45
    $region44: #{tpu_custom_call.1} parent=1 // pred_region
      %s792 = ssub.s32 128, 128
      %793 = vsyncadd [#allocation6], %s792
      %s795 = sshll.u32 [#allocation5], 4
      %s796 = int_to_ptr.vmem [resolvable:$true] %s795
      %798 = dma.vmem_to_hbm [thread:$0]  %s796, 128, %s10, [#allocation6]
    $region45: #{tpu_custom_call.1} parent=1 // pred_fallthru
      _
    // Predicated region
    $region46: #{tpu_custom_call.1} parent=1 // pred_check
      _
    $region47: #{tpu_custom_call.1} parent=1 // pred_check_branch
      %800 = sbr.rel (0) target = $region49
    $region48: #{tpu_custom_call.1} parent=1 // pred_region
      %801 = dma.done [#allocation6], 128
    $region49: #{tpu_custom_call.1} parent=1 // pred_fallthru
      _
    %802 = vsyncpa [#allocation6], 1

</llo_original>
